<compile_context>
chip_gen: v6e
topology: v6e:2x2x1
jax: 0.10.0
libtpu: 0.0.40
codegen_flags: <defaults>
</compile_context>

<pallas_src>
import functools
import numpy as np
import jax
import jax.numpy as jnp
from jax.experimental import pallas as pl
from jax.experimental.pallas import tpu as pltpu

_MASK_VALUE = float(np.finfo(np.float32).max)   # reference mask fill value
_NEG_BIAS = -1e30                               # additive mask bias in kernel


def _round_up(a, m):
    return ((a + m - 1) // m) * m


def _padding_to_multiple_of(n, mult):
    r = n % mult
    return 0 if r == 0 else mult - r


def _vmem_limit_bytes(fraction=0.75, fallback=32 * 1024 * 1024):
    """Per-generation scoped-VMEM budget (~96 MiB v5e/v6e, ~48 MiB v7x)."""
    try:
        cap = int(pltpu.get_tpu_info().vmem_capacity_bytes)
        return max(16 * 1024 * 1024, min(int(cap * fraction), 128 * 1024 * 1024))
    except Exception:
        return fallback


# ----------------------------------------------------------------------------
# Linear projection kernels (to_q, to_kv, to_out)
# ----------------------------------------------------------------------------
def _linear_bias_kernel(x_ref, w_ref, b_ref, o_ref):
    acc = jnp.dot(x_ref[...], w_ref[...], preferred_element_type=jnp.float32)
    o_ref[...] = (acc + b_ref[...]).astype(o_ref.dtype)


def _linear_nobias_kernel(x_ref, w_ref, o_ref):
    acc = jnp.dot(x_ref[...], w_ref[...], preferred_element_type=jnp.float32)
    o_ref[...] = acc.astype(o_ref.dtype)


def pallas_linear(x, w, bias=None, *, tm=256):
    """y = x @ w (+ bias).  x: (..., Din), w: (Din, Dout)."""
    *lead, Din = x.shape
    Dout = w.shape[1]
    M = int(np.prod(lead)) if lead else 1
    x2 = x.reshape(M, Din)

    tm_eff = min(tm, _round_up(M, 8))       # big row tile adapted to the input
    Mp = _round_up(M, tm_eff)
    Dp = _round_up(Dout, 128)               # lane-dense output

    if Mp != M:
        x2 = jnp.pad(x2, ((0, Mp - M), (0, 0)))
    wp = w if Dp == Dout else jnp.pad(w, ((0, 0), (0, Dp - Dout)))

    grid = (Mp // tm_eff,)
    x_spec = pl.BlockSpec((tm_eff, Din), lambda i: (i, 0))
    w_spec = pl.BlockSpec((Din, Dp), lambda i: (0, 0))
    o_spec = pl.BlockSpec((tm_eff, Dp), lambda i: (i, 0))
    cparams = pltpu.CompilerParams(
        dimension_semantics=("parallel",),
        vmem_limit_bytes=_vmem_limit_bytes(),
    )

    if bias is None:
        out = pl.pallas_call(
            _linear_nobias_kernel,
            out_shape=jax.ShapeDtypeStruct((Mp, Dp), x.dtype),
            grid=grid,
            in_specs=[x_spec, w_spec],
            out_specs=o_spec,
            compiler_params=cparams,
        )(x2, wp)
    else:
        bp = bias if Dp == Dout else jnp.pad(bias, (0, Dp - Dout))
        bp = bp.reshape(1, Dp).astype(jnp.float32)
        out = pl.pallas_call(
            _linear_bias_kernel,
            out_shape=jax.ShapeDtypeStruct((Mp, Dp), x.dtype),
            grid=grid,
            in_specs=[x_spec, w_spec, pl.BlockSpec((1, Dp), lambda i: (0, 0))],
            out_specs=o_spec,
            compiler_params=cparams,
        )(x2, wp, bp)

    if Mp != M or Dp != Dout:
        out = out[:M, :Dout]
    return out.reshape(*lead, Dout)


# ----------------------------------------------------------------------------
# Window geometry / static bias tables
# ----------------------------------------------------------------------------
def _window_geometry(kernel_size, dilation, causal):
    kf, _, _ = kernel_size
    df, _, _ = dilation
    mult = 2 if causal else 1
    lf = df * (kf - 1) // 2
    pad_before = lf * mult
    pad_after = 0 if causal else lf
    nf = pad_before + pad_after + 1                    # halo frames per query
    frame_off0 = -pad_before
    f_taps = {t * df - lf * mult for t in range(kf)}
    frame_is_tap = tuple((frame_off0 + j) in f_taps for j in range(nf))
    return pad_before, pad_after, nf, frame_off0, frame_is_tap


def build_spatial_bias(fmap_size, kernel_size, dilation, causal):
    """(tpf, tpf) additive bias: 0 where the kv grid position lies inside the
    query's (kh, kw) spatial window, -1e30 otherwise (frame part is added
    in-kernel from pl.program_id)."""
    _, kh, kw = kernel_size
    _, dh, dw = dilation
    mult = 2 if causal else 1
    lh = dh * (kh - 1) // 2
    lw = dw * (kw - 1) // 2
    h_taps = np.array(sorted({t * dh - lh * mult for t in range(kh)}))
    w_taps = np.array(sorted({t * dw - lw * mult for t in range(kw)}))
    tpf = fmap_size * fmap_size
    idx = np.arange(tpf)
    hi, wi = idx // fmap_size, idx % fmap_size
    dH = hi[None, :] - hi[:, None]                     # kv minus query (rows=q)
    dW = wi[None, :] - wi[:, None]
    ok = np.isin(dH, h_taps) & np.isin(dW, w_taps)
    return jnp.asarray(np.where(ok, 0.0, _NEG_BIAS).astype(np.float32))


# ----------------------------------------------------------------------------
# Sparse 3D neighborhood attention kernel (frame-halo formulation)
# ----------------------------------------------------------------------------
def _nbhd_attn_kernel(q_ref, kvb_ref, spat_ref, th_ref, *rest,
                      scale, heads, dim_head, nf, steps_per_frame,
                      frame_off0, frame_is_tap, max_frames):
    kv_refs = rest[:nf]
    o_ref = rest[nf]
    H, d = heads, dim_head
    inner = H * d
    f32 = jnp.float32

    # --- additive mask bias for this query tile ------------------------------
    f = pl.program_id(1) // steps_per_frame            # query frame index
    spat = spat_ref[...]                                # (Tq, tpf) : 0 / -1e30
    blocks = []
    for j in range(nf):
        if frame_is_tap[j]:
            ff = f + (frame_off0 + j)
            ok = jnp.logical_and(ff >= 0, ff < max_frames)
            fb = jnp.where(ok, f32(0.0), f32(_NEG_BIAS))
            blocks.append(spat + fb)
        else:
            blocks.append(jnp.full_like(spat, _NEG_BIAS))
    bias = blocks[0] if nf == 1 else jnp.concatenate(blocks, axis=1)  # (Tq, Hl)

    kvb = kvb_ref[...].astype(f32)                      # (1, 2*inner) BOS k|v

    # --- per-head softmax over (halo + BOS) ----------------------------------
    p_list, pb_list = [], []
    for h in range(H):
        lo = h * d
        q_h = q_ref[:, lo:lo + d].astype(f32) * scale                   # (Tq, d)
        k_h = jnp.concatenate(
            [kv_refs[j][:, lo:lo + d] for j in range(nf)], axis=0
        ).astype(f32)                                                   # (Hl, d)
        s = jax.lax.dot_general(q_h, k_h, (((1,), (1,)), ((), ())),
                                preferred_element_type=f32)             # MXU
        s = s + bias
        kb_h = kvb[:, lo:lo + d]                                        # (1, d)
        sb = jnp.sum(q_h * kb_h, axis=1, keepdims=True)                 # (Tq, 1)
        m = jnp.maximum(jnp.max(s, axis=1, keepdims=True), sb)
        p = jnp.exp(s - m)
        pb = jnp.exp(sb - m)
        # BOS column is always unmasked -> denominator is never zero.
        r = pl.reciprocal(jnp.sum(p, axis=1, keepdims=True) + pb, approx=True)
        p_list.append(p * r)
        pb_list.append(pb * r)

    # --- talking heads mixing + attn @ v --------------------------------------
    outs = []
    for h in range(H):
        acc = p_list[0] * th_ref[h, 0]
        accb = pb_list[0] * th_ref[h, 0]
        for g in range(1, H):
            w = th_ref[h, g]
            acc = acc + p_list[g] * w
            accb = accb + pb_list[g] * w
        lo = h * d
        v_h = jnp.concatenate(
            [kv_refs[j][:, inner + lo:inner + lo + d] for j in range(nf)], axis=0
        ).astype(f32)                                                   # (Hl, d)
        out_h = jax.lax.dot_general(acc, v_h, (((1,), (0,)), ((), ())),
                                    preferred_element_type=f32)         # MXU
        vb_h = kvb[:, inner + lo:inner + lo + d]                        # (1, d)
        out_h = out_h + accb * vb_h
        outs.append(out_h)
    o_ref[...] = jnp.concatenate(outs, axis=1).astype(o_ref.dtype)      # (Tq, inner)


def pallas_nbhd_attention(q_tok, kv_fp, kv_bos, spat_bias, th, *, scale,
                          heads, dim_head, tpf, nf, num_frames, max_frames,
                          frame_off0, frame_is_tap, q_tile=None):
    """q_tok: (B, Nq_pad, inner)   kv_fp: (B, (num_frames+nf-1)*tpf, 2*inner)
       kv_bos: (B, 1, 2*inner)     spat_bias: (tpf, tpf)   th: (H, H)."""
    B, Nq_pad, inner = q_tok.shape
    two_inner = kv_fp.shape[-1]
    assert Nq_pad == num_frames * tpf
    assert tpf % 8 == 0, "fmap_size**2 must be a multiple of 8 for TPU tiling"

    # Query rows per grid step (must divide tpf).  Smaller tiles = less VMEM
    # (useful on v7x); tpf itself is good on v5e/v6e.
    Tq = tpf if q_tile is None else min(q_tile, tpf)
    while tpf % Tq != 0 or Tq % 8 != 0:
        Tq -= 8
    while Tq > 256 and Tq % 2 == 0:
        Tq //= 2
    steps_per_frame = tpf // Tq
    grid = (B, num_frames * steps_per_frame)

    kernel = functools.partial(
        _nbhd_attn_kernel, scale=scale, heads=heads, dim_head=dim_head, nf=nf,
        steps_per_frame=steps_per_frame, frame_off0=frame_off0,
        frame_is_tap=frame_is_tap, max_frames=max_frames)

    def _halo_map(j):
        def im(b, i):
            return (b, i // steps_per_frame + j, 0)
        return im

    in_specs = [
        pl.BlockSpec((None, Tq, inner), lambda b, i: (b, i, 0)),          # q
        pl.BlockSpec((None, 1, two_inner), lambda b, i: (b, 0, 0)),       # BOS kv
        pl.BlockSpec((Tq, tpf), lambda b, i: (i % steps_per_frame, 0)),   # spatial bias
        pl.BlockSpec(memory_space=pltpu.MemorySpace.SMEM),                # talking heads
    ] + [
        pl.BlockSpec((None, tpf, two_inner), _halo_map(j)) for j in range(nf)
    ]
    out_specs = pl.BlockSpec((None, Tq, inner), lambda b, i: (b, i, 0))

    return pl.pallas_call(
        kernel,
        out_shape=jax.ShapeDtypeStruct((B, Nq_pad, inner), q_tok.dtype),
        grid=grid,
        in_specs=in_specs,
        out_specs=out_specs,
        compiler_params=pltpu.CompilerParams(
            dimension_semantics=("parallel", "parallel"),
            vmem_limit_bytes=_vmem_limit_bytes(),
        ),
    )(q_tok, kv_bos, spat_bias, th, *([kv_fp] * nf))


# ----------------------------------------------------------------------------
# Full forward (Pallas)
# ----------------------------------------------------------------------------
def sparse3dna_forward(x, params, *, video_shape, heads, dim_head,
                       kernel_size=(3, 3, 3), dilation=(1, 1, 1),
                       causal=False, q_tile=None):
    B, n, _ = x.shape
    H, d = heads, dim_head
    inner = H * d
    scale = d ** -0.5
    max_frames, fmap_size, _ = video_shape
    tpf = fmap_size * fmap_size
    w_q, w_kv, w_th = params["w_q"], params["w_kv"], params["w_th"]
    w_out, b_out = params["w_out"], params["b_out"]

    if n == 1:                                   # BOS-only path
        v = pallas_linear(x, w_kv)[..., inner:]
        return pallas_linear(v, w_out, b_out)

    padding = _padding_to_multiple_of(n - 1, tpf)
    num_frames = (n + padding) // tpf
    x_pad = jnp.pad(x, ((0, 0), (0, padding), (0, 0))) if padding else x

    q = pallas_linear(x, w_q)                    # (B, n, inner)
    kv = pallas_linear(x_pad, w_kv)              # (B, n + padding, 2*inner)

    kv_bos = kv[:, :1]                           # (B, 1, 2*inner)
    kv_tok = kv[:, 1:]                           # (B, num_frames*tpf, 2*inner)
    q_tok = q[:, 1:]                             # (B, n-1, inner)

    Nq = n - 1
    Nq_pad = num_frames * tpf
    if Nq_pad != Nq:
        # Padded query rows see an all-zero window plus the always-unmasked BOS
        # column -> finite (discarded) results; mirrors the module's kv padding.
        q_tok = jnp.pad(q_tok, ((0, 0), (0, Nq_pad - Nq), (0, 0)))

    pad_before, pad_after, nf, frame_off0, frame_is_tap = _window_geometry(
        kernel_size, dilation, causal)
    kv_fp = jnp.pad(kv_tok,
                    ((0, 0), (pad_before * tpf, pad_after * tpf), (0, 0)))

    spat = build_spatial_bias(fmap_size, kernel_size, dilation, causal)

    attn_out = pallas_nbhd_attention(
        q_tok, kv_fp, kv_bos, spat, w_th, scale=scale, heads=H, dim_head=d,
        tpf=tpf, nf=nf, num_frames=num_frames, max_frames=max_frames,
        frame_off0=frame_off0, frame_is_tap=frame_is_tap, q_tile=q_tile)

    if Nq_pad != Nq:
        attn_out = attn_out[:, :Nq]
    bos_out = kv_bos[:, :, inner:]               # BOS output = its own value
    out = jnp.concatenate([bos_out, attn_out], axis=1)
    return pallas_linear(out, w_out, b_out)


# ----------------------------------------------------------------------------
# Pure-jnp reference (mirrors the PyTorch module via an explicit unfold gather)
# ----------------------------------------------------------------------------
def build_sparse3dna_tables(*, n_q, num_frames, max_frames, fmap_size,
                            kernel_size, dilation, causal):
    kf, kh, kw = kernel_size
    df, dh, dw = dilation
    mult = 2 if causal else 1
    lf = df * (kf - 1) // 2 * mult
    lh = dh * (kh - 1) // 2 * mult
    lw = dw * (kw - 1) // 2 * mult
    tpf = fmap_size * fmap_size
    n_kv = num_frames * tpf

    i = np.arange(n_q)
    fi = i // tpf
    hi = (i // fmap_size) % fmap_size
    wi = i % fmap_size

    jf, jh, jw = np.meshgrid(np.arange(kf), np.arange(kh), np.arange(kw),
                             indexing="ij")
    jf, jh, jw = jf.reshape(-1), jh.reshape(-1), jw.reshape(-1)

    ff = fi[:, None] + jf[None, :] * df - lf
    hh = hi[:, None] + jh[None, :] * dh - lh
    ww = wi[:, None] + jw[None, :] * dw - lw

    in_hw = (hh >= 0) & (hh < fmap_size) & (ww >= 0) & (ww < fmap_size)
    valid_kv = in_hw & (ff >= 0) & (ff < num_frames)
    idx = ff * tpf + hh * fmap_size + ww
    idx = np.where(valid_kv, idx, n_kv).astype(np.int32)

    valid_full = in_hw & (ff >= 0) & (ff < max_frames)
    masked = ~valid_full
    mask = np.concatenate([np.zeros((n_q, 1), bool), masked], 1)
    return jnp.asarray(idx), jnp.asarray(mask.astype(np.float32))


def sparse3dna_ref(x, params, *, video_shape, heads, dim_head,
                   kernel_size=(3, 3, 3), dilation=(1, 1, 1), causal=False):
    B, n, _ = x.shape
    H, dh = heads, dim_head
    inner = H * dh
    scale = dh ** -0.5
    max_frames, fmap_size, _ = video_shape
    tpf = fmap_size * fmap_size
    hp = jax.lax.Precision.HIGHEST
    w_q, w_kv, w_th = params["w_q"], params["w_kv"], params["w_th"]
    w_out, b_out = params["w_out"], params["b_out"]

    if n == 1:
        v = jnp.dot(x, w_kv, precision=hp)[..., inner:]
        return jnp.dot(v, w_out, precision=hp) + b_out

    padding = _padding_to_multiple_of(n - 1, tpf)
    num_frames = (n + padding) // tpf
    x_pad = jnp.pad(x, ((0, 0), (0, padding), (0, 0))) if padding else x

    q = jnp.dot(x, w_q, precision=hp)
    kv = jnp.dot(x_pad, w_kv, precision=hp)
    k, v = kv[..., :inner], kv[..., inner:]

    def split_heads(t):
        Bn, Nn, _ = t.shape
        return t.reshape(Bn, Nn, H, dh).transpose(0, 2, 1, 3).reshape(Bn * H, Nn, dh)

    q, k, v = map(split_heads, (q, k, v))
    q = q[:, 1:] * scale
    k_bos, k_tok = k[:, :1], k[:, 1:]
    v_bos, v_tok = v[:, :1], v[:, 1:]
    Nq = n - 1

    nbr_idx, mask = build_sparse3dna_tables(
        n_q=Nq, num_frames=num_frames, max_frames=max_frames,
        fmap_size=fmap_size, kernel_size=kernel_size, dilation=dilation,
        causal=causal)

    def gather_windows(tok, bos):
        tok_z = jnp.concatenate([tok, jnp.zeros_like(tok[:, :1])], axis=1)
        win = jnp.take(tok_z, nbr_idx, axis=1)
        bos_b = jnp.broadcast_to(bos[:, None], (tok.shape[0], Nq, 1, dh))
        return jnp.concatenate([bos_b, win], axis=2)

    k_win = gather_windows(k_tok, k_bos)
    v_win = gather_windows(v_tok, v_bos)

    sim = jnp.einsum("bid,bijd->bij", q, k_win, precision=hp)
    sim = jnp.where(mask[None] > 0.5, -_MASK_VALUE, sim)
    attn = jax.nn.softmax(sim.astype(jnp.float32), axis=-1)
    attn = attn.reshape(B, H, Nq, -1)
    attn = jnp.einsum("hg,bgij->bhij", w_th, attn, precision=hp)
    attn = attn.reshape(B * H, Nq, -1)
    out = jnp.einsum("bij,bijd->bid", attn, v_win.astype(jnp.float32),
                     precision=hp).astype(x.dtype)

    def merge_heads(t):
        Nn = t.shape[1]
        return t.reshape(B, H, Nn, dh).transpose(0, 2, 1, 3).reshape(B, Nn, inner)

    out = jnp.concatenate([merge_heads(v_bos), merge_heads(out)], axis=1)
    return jnp.dot(out, w_out, precision=hp) + b_out


if __name__ == "__main__":
    key = jax.random.PRNGKey(0)

    B = 2
    video_shape = (2, 4, 4)            # (frames, height, width) -> 32 tokens
    dim = 128
    heads = 2
    dim_head = 64
    inner = heads * dim_head
    kernel_size = (3, 3, 3)
    dilation = (1, 1, 1)
    n_full = 1 + video_shape[0] * video_shape[1] * video_shape[2]   # BOS + video

    kx, kq, kkv, kth, kwo, kbo = jax.random.split(key, 6)
    params = {
        "w_q":   jax.random.normal(kq,  (dim, inner), jnp.float32) * dim ** -0.5,
        "w_kv":  jax.random.normal(kkv, (dim, 2 * inner), jnp.float32) * dim ** -0.5,
        "w_th":  jax.random.normal(kth, (heads, heads), jnp.float32) * heads ** -0.5,
        "w_out": jax.random.normal(kwo, (inner, dim), jnp.float32) * inner ** -0.5,
        "b_out": jax.random.normal(kbo, (dim,), jnp.float32) * 0.01,
    }

    cfg = dict(video_shape=video_shape, heads=heads, dim_head=dim_head,
               kernel_size=kernel_size, dilation=dilation, causal=False)

    # full video and a partially-filled (query-padded) video
    for n in (n_full, 25):
        x = jax.random.normal(kx, (B, n, dim), dtype=jnp.float32)
        out = jax.block_until_ready(sparse3dna_forward(x, params, **cfg))
        ref = sparse3dna_ref(x, params, **cfg)
        assert out.shape == (B, n, dim)
        assert bool(jnp.all(jnp.isfinite(out)))
        err = float(jnp.max(jnp.abs(out - ref)))
        assert jnp.allclose(out, ref, atol=2e-2, rtol=2e-2), (
            f"mismatch vs reference (n={n}), max abs err = {err}")
    print("KERNEL_OK")
</pallas_src>

<mosaic_0001>
module attributes {stable_mosaic.version = 11 : i64} {
  func.func @_linear_nobias_kernel(%arg0: i32, %arg1: memref<72x128xf32, #tpu.memory_space<vmem>>, %arg2: memref<128x128xf32, #tpu.memory_space<vmem>>, %arg3: memref<72x128xf32, #tpu.memory_space<vmem>>) attributes {dimension_semantics = [#tpu.dimension_semantics<parallel>], iteration_bounds = array<i64: 1>, scalar_prefetch = 0 : i64, scratch_operands = 0 : i64, tpu.core_type = #tpu.core_type<tc>, window_params = [{transform_indices = @transform_0, window_bounds = array<i64: 72, 128>}, {pipeline_mode = #tpu.pipeline_mode<synchronous>, transform_indices = @transform_1, window_bounds = array<i64: 128, 128>}, {transform_indices = @transform_2, window_bounds = array<i64: 72, 128>}]} {
    %c0 = arith.constant 0 : index
    %c0_0 = arith.constant 0 : index
    %0 = vector.load %arg1[%c0, %c0_0] : memref<72x128xf32, #tpu.memory_space<vmem>>, vector<72x128xf32>
    %c0_1 = arith.constant 0 : index
    %c0_2 = arith.constant 0 : index
    %1 = vector.load %arg2[%c0_1, %c0_2] : memref<128x128xf32, #tpu.memory_space<vmem>>, vector<128x128xf32>
    %cst = arith.constant dense<0.000000e+00> : vector<72x128xf32>
    %2 = tpu.matmul %0, %1, %cst {dimension_numbers = #tpu.dot_dimension_numbers<[1], [0], [0], [1], [0, 0, 1, 1], [], []>} : vector<72x128xf32>, vector<128x128xf32>, vector<72x128xf32> -> vector<72x128xf32>
    %c0_3 = arith.constant 0 : index
    %c0_4 = arith.constant 0 : index
    %3 = vector.load %arg3[%c0_3, %c0_4] : memref<72x128xf32, #tpu.memory_space<vmem>>, vector<72x128xf32>
    tpu.vector_store %arg3[%c0_3, %c0_4], %2 {strides = array<i32>} : memref<72x128xf32, #tpu.memory_space<vmem>>, vector<72x128xf32>,
    return
  }
  func.func @transform_0(%arg0: i32) -> (i32, i32) {
    %c0_i32 = arith.constant 0 : i32
    %c0_i32_0 = arith.constant 0 : i32
    return %arg0, %c0_i32 : i32, i32
  }
  func.func @transform_1(%arg0: i32) -> (i32, i32) {
    %c0_i32 = arith.constant 0 : i32
    %c0_i32_0 = arith.constant 0 : i32
    %c0_i32_1 = arith.constant 0 : i32
    return %c0_i32, %c0_i32_0 : i32, i32
  }
  func.func @transform_2(%arg0: i32) -> (i32, i32) {
    %c0_i32 = arith.constant 0 : i32
    %c0_i32_0 = arith.constant 0 : i32
    return %arg0, %c0_i32 : i32, i32
  }
}

</mosaic_0001>

<llo_original>
// kernel: tpu_custom_call.1
$region0: #{tpu_custom_call.1}
  #allocation0 [shape = 'u32[]', space=smem, size = 0x4, offset = 0x4, fixed_abs, tag = 'smem constant byte address 0x4 - core index']
  #allocation1 [shape = 'u32[144,128]{1,0:T(1,128)}', space=vmem, size = 0x12000, scoped, tag = 'internal scratch']
  %s0 = inlined_call_operand.hbm [shape: f32[72,128], index: 0, kind: input, shape index: {}]
  %s1 = inlined_call_operand.hbm [shape: f32[128,128], index: 1, kind: input, shape index: {}]
  %s2 = inlined_call_operand.hbm [shape: f32[72,128], index: 2, kind: output, shape index: {}]
  %s3 = sld [smem:[#allocation0]]
  $region26: #{tpu_custom_call.1} parent=0
    _
  %s5 = ssub.s32 1, %s3
  %s6 = scalar_select 0, %s5, %s3
  $region1: #{tpu_custom_call.1} parent=0
    #allocation2 [shape = 'u8[36864]{0}', space=vmem, size = 0x9000, scoped, tag = 'input window, operand 0, single buffered']
    #allocation3 [shape = 's32[1]{0}', space=sflag, size = 0x4, scoped, tag = 'scoped memory for tpu_custom_call.1']
    #allocation4 [shape = 's32[1]{0}', space=sflag, size = 0x4, scoped, tag = 'scoped memory for tpu_custom_call.1']
    #allocation5 [shape = 'u8[65536]{0}', space=vmem, size = 0x10000, scoped, tag = 'input window, operand 1, single buffered']
    #allocation6 [shape = 's32[1]{0}', space=sflag, size = 0x4, scoped, tag = 'scoped memory for tpu_custom_call.1']
    #allocation7 [shape = 'u8[36864]{0}', space=vmem, size = 0x9000, scoped, tag = 'output window, operand 0, single buffered']
    %7 = vsyncpa [#allocation3], 0
    %8 = vsyncpa [#allocation6], 0
    %9 = vsyncpa [#allocation4], 0
    // Predicated region
    $region2: #{tpu_custom_call.1} parent=1 // pred_check
      _
    $region3: #{tpu_custom_call.1} parent=1 // pred_check_branch
      %11 = sbr.rel (0) target = $region5
    $region4: #{tpu_custom_call.1} parent=1 // pred_region
      %s13 = ssub.s32 1152, 1152
      %14 = vsyncadd [#allocation3], %s13
      %s15 = sshll.u32 [#allocation2], 4
      %s16 = int_to_ptr.vmem [resolvable:$true] %s15
      %21 = dma.hbm_to_vmem [thread:$0]  %s0, 1152, %s16, [#allocation3], 128, 128, 8
    $region5: #{tpu_custom_call.1} parent=1 // pred_fallthru
      _
    // Predicated region
    $region6: #{tpu_custom_call.1} parent=1 // pred_check
      _
    $region7: #{tpu_custom_call.1} parent=1 // pred_check_branch
      %23 = sbr.rel (0) target = $region9
    $region8: #{tpu_custom_call.1} parent=1 // pred_region
      %s25 = ssub.s32 2048, 2048
      %26 = vsyncadd [#allocation6], %s25
      %s27 = sshll.u32 [#allocation5], 4
      %s28 = int_to_ptr.vmem [resolvable:$true] %s27
      %33 = dma.hbm_to_vmem [thread:$0]  %s1, 2048, %s28, [#allocation6], 128, 128, 8
    $region9: #{tpu_custom_call.1} parent=1 // pred_fallthru
      _
    // Predicated region
    $region10: #{tpu_custom_call.1} parent=1 // pred_check
      _
    $region11: #{tpu_custom_call.1} parent=1 // pred_check_branch
      %35 = sbr.rel (0) target = $region13
    $region12: #{tpu_custom_call.1} parent=1 // pred_region
      %36 = dma.done [#allocation3], 1152
    $region13: #{tpu_custom_call.1} parent=1 // pred_fallthru
      _
    // Predicated region
    $region14: #{tpu_custom_call.1} parent=1 // pred_check
      _
    $region15: #{tpu_custom_call.1} parent=1 // pred_check_branch
      %38 = sbr.rel (0) target = $region17
    $region16: #{tpu_custom_call.1} parent=1 // pred_region
      %39 = dma.done [#allocation6], 2048
    $region17: #{tpu_custom_call.1} parent=1 // pred_fallthru
      _
    %v40 = vld [vmem:[#allocation2] sm:$0xff]
    %v41 = vld [vmem:[#allocation2 + $0x8] sm:$0xff]
    %v42 = vld [vmem:[#allocation2 + $0x10] sm:$0xff]
    %v43 = vld [vmem:[#allocation2 + $0x18] sm:$0xff]
    %v44 = vld [vmem:[#allocation2 + $0x20] sm:$0xff]
    %v45 = vld [vmem:[#allocation2 + $0x28] sm:$0xff]
    %v46 = vld [vmem:[#allocation2 + $0x30] sm:$0xff]
    %v47 = vld [vmem:[#allocation2 + $0x38] sm:$0xff]
    %v48 = vld [vmem:[#allocation2 + $0x40] sm:$0xff]
    %v49 = vld [vmem:[#allocation5] sm:$0xff]
    %v50 = vld [vmem:[#allocation5 + $0x8] sm:$0xff]
    %v51 = vld [vmem:[#allocation5 + $0x10] sm:$0xff]
    %v52 = vld [vmem:[#allocation5 + $0x18] sm:$0xff]
    %v53 = vld [vmem:[#allocation5 + $0x20] sm:$0xff]
    %v54 = vld [vmem:[#allocation5 + $0x28] sm:$0xff]
    %v55 = vld [vmem:[#allocation5 + $0x30] sm:$0xff]
    %v56 = vld [vmem:[#allocation5 + $0x38] sm:$0xff]
    %v57 = vld [vmem:[#allocation5 + $0x40] sm:$0xff]
    %v58 = vld [vmem:[#allocation5 + $0x48] sm:$0xff]
    %v59 = vld [vmem:[#allocation5 + $0x50] sm:$0xff]
    %v60 = vld [vmem:[#allocation5 + $0x58] sm:$0xff]
    %v61 = vld [vmem:[#allocation5 + $0x60] sm:$0xff]
    %v62 = vld [vmem:[#allocation5 + $0x68] sm:$0xff]
    %v63 = vld [vmem:[#allocation5 + $0x70] sm:$0xff]
    %v64 = vld [vmem:[#allocation5 + $0x78] sm:$0xff]
    %65 = vmatprep.subr.mxu0 0.0
    %66 = vmatpush1.msra.mxu0 %v64
    %67 = vmatprep.subr.mxu0 0.0
    %68 = vmatpush1.msra.mxu0 %v63
    %69 = vmatprep.subr.mxu0 0.0
    %70 = vmatpush1.msra.mxu0 %v62
    %71 = vmatprep.subr.mxu0 0.0
    %72 = vmatpush1.msra.mxu0 %v61
    %73 = vmatprep.subr.mxu0 0.0
    %74 = vmatpush1.msra.mxu0 %v60
    %75 = vmatprep.subr.mxu0 0.0
    %76 = vmatpush1.msra.mxu0 %v59
    %77 = vmatprep.subr.mxu0 0.0
    %78 = vmatpush1.msra.mxu0 %v58
    %79 = vmatprep.subr.mxu0 0.0
    %80 = vmatpush1.msra.mxu0 %v57
    %81 = vmatprep.subr.mxu0 0.0
    %82 = vmatpush1.msra.mxu0 %v56
    %83 = vmatprep.subr.mxu0 0.0
    %84 = vmatpush1.msra.mxu0 %v55
    %85 = vmatprep.subr.mxu0 0.0
    %86 = vmatpush1.msra.mxu0 %v54
    %87 = vmatprep.subr.mxu0 0.0
    %88 = vmatpush1.msra.mxu0 %v53
    %89 = vmatprep.subr.mxu0 0.0
    %90 = vmatpush1.msra.mxu0 %v52
    %91 = vmatprep.subr.mxu0 0.0
    %92 = vmatpush1.msra.mxu0 %v51
    %93 = vmatprep.subr.mxu0 0.0
    %94 = vmatpush1.msra.mxu0 %v50
    %95 = vmatprep.subr.mxu0 0.0
    %96 = vmatpush1.msra.mxu0 %v49
    %97 = vmatprep.subr.mxu0 0.0
    %98 = vmatpush2.msra.mxu0 0.0
    %99 = vmatprep.subr.mxu0 0.0
    %100 = vmatpush2.msra.mxu0 0.0
    %101 = vmatprep.subr.mxu0 0.0
    %102 = vmatpush2.msra.mxu0 0.0
    %103 = vmatprep.subr.mxu0 0.0
    %104 = vmatpush2.msra.mxu0 0.0
    %105 = vmatprep.subr.mxu0 0.0
    %106 = vmatpush2.msra.mxu0 0.0
    %107 = vmatprep.subr.mxu0 0.0
    %108 = vmatpush2.msra.mxu0 0.0
    %109 = vmatprep.subr.mxu0 0.0
    %110 = vmatpush2.msra.mxu0 0.0
    %111 = vmatprep.subr.mxu0 0.0
    %112 = vmatpush2.msra.mxu0 0.0
    %113 = vmatprep.subr.mxu0 0.0
    %114 = vmatpush2.msra.mxu0 0.0
    %115 = vmatprep.subr.mxu0 0.0
    %116 = vmatpush2.msra.mxu0 0.0
    %117 = vmatprep.subr.mxu0 0.0
    %118 = vmatpush2.msra.mxu0 0.0
    %119 = vmatprep.subr.mxu0 0.0
    %120 = vmatpush2.msra.mxu0 0.0
    %121 = vmatprep.subr.mxu0 0.0
    %122 = vmatpush2.msra.mxu0 0.0
    %123 = vmatprep.subr.mxu0 0.0
    %124 = vmatpush2.msra.mxu0 0.0
    %125 = vmatprep.subr.mxu0 0.0
    %126 = vmatpush2.msra.mxu0 0.0
    %127 = vmatprep.subr.mxu0 0.0
    %128 = vmatpush2.msra.mxu0 0.0
    %129 = vmatprep.mubr.f32.mxu0 0.0
    %130 = vmatmul.mubr.f32.gmra.mxu0 %v40
    %v131 = vpop.f32.mrf.mxu0
    %v132 = vadd.f32 0.0, %v131
    %v133 = vpop.f32.mrf.mxu0
    %134 = vmatprep.mubr.f32.mxu0 0.0
    %135 = vmatmul.mubr.f32.gmra.mxu0 %v41
    %v136 = vpop.f32.mrf.mxu0
    %v137 = vadd.f32 0.0, %v136
    %v138 = vpop.f32.mrf.mxu0
    %139 = vmatprep.mubr.f32.mxu0 0.0
    %140 = vmatmul.mubr.f32.gmra.mxu0 %v42
    %v141 = vpop.f32.mrf.mxu0
    %v142 = vadd.f32 0.0, %v141
    %v143 = vpop.f32.mrf.mxu0
    %144 = vmatprep.mubr.f32.mxu0 0.0
    %145 = vmatmul.mubr.f32.gmra.mxu0 %v43
    %v146 = vpop.f32.mrf.mxu0
    %v147 = vadd.f32 0.0, %v146
    %v148 = vpop.f32.mrf.mxu0
    %149 = vmatprep.mubr.f32.mxu0 0.0
    %150 = vmatmul.mubr.f32.gmra.mxu0 %v44
    %v151 = vpop.f32.mrf.mxu0
    %v152 = vadd.f32 0.0, %v151
    %v153 = vpop.f32.mrf.mxu0
    %154 = vmatprep.mubr.f32.mxu0 0.0
    %155 = vmatmul.mubr.f32.gmra.mxu0 %v45
    %v156 = vpop.f32.mrf.mxu0
    %v157 = vadd.f32 0.0, %v156
    %v158 = vpop.f32.mrf.mxu0
    %159 = vmatprep.mubr.f32.mxu0 0.0
    %160 = vmatmul.mubr.f32.gmra.mxu0 %v46
    %v161 = vpop.f32.mrf.mxu0
    %v162 = vadd.f32 0.0, %v161
    %v163 = vpop.f32.mrf.mxu0
    %164 = vmatprep.mubr.f32.mxu0 0.0
    %165 = vmatmul.mubr.f32.gmra.mxu0 %v47
    %v166 = vpop.f32.mrf.mxu0
    %v167 = vadd.f32 0.0, %v166
    %v168 = vpop.f32.mrf.mxu0
    %169 = vmatprep.mubr.f32.mxu0 0.0
    %170 = vmatmul.mubr.f32.gmra.mxu0 %v48
    %v171 = vpop.f32.mrf.mxu0
    %v172 = vadd.f32 0.0, %v171
    %v173 = vpop.f32.mrf.mxu0
    %174 = vdwg.mxu0
    %175 = vst [vmem:[#allocation7] sm:$0xff] %v132
    %176 = vst [vmem:[#allocation7 + $0x8] sm:$0xff] %v137
    %177 = vst [vmem:[#allocation7 + $0x10] sm:$0xff] %v142
    %178 = vst [vmem:[#allocation7 + $0x18] sm:$0xff] %v147
    %179 = vst [vmem:[#allocation7 + $0x20] sm:$0xff] %v152
    %180 = vst [vmem:[#allocation7 + $0x28] sm:$0xff] %v157
    %181 = vst [vmem:[#allocation7 + $0x30] sm:$0xff] %v162
    %182 = vst [vmem:[#allocation7 + $0x38] sm:$0xff] %v167
    %183 = vst [vmem:[#allocation7 + $0x40] sm:$0xff] %v172
    // Predicated region
    $region18: #{tpu_custom_call.1} parent=1 // pred_check
      _
    $region19: #{tpu_custom_call.1} parent=1 // pred_check_branch
      %185 = sbr.rel (0) target = $region21
    $region20: #{tpu_custom_call.1} parent=1 // pred_region
      %s187 = ssub.s32 1152, 1152
      %188 = vsyncadd [#allocation4], %s187
      %s189 = sshll.u32 [#allocation7], 4
      %s190 = int_to_ptr.vmem [resolvable:$true] %s189
      %195 = dma.vmem_to_hbm [thread:$0]  %s190, 1152, %s2, [#allocation4], 128, 128, 8
    $region21: #{tpu_custom_call.1} parent=1 // pred_fallthru
      _
    // Predicated region
    $region22: #{tpu_custom_call.1} parent=1 // pred_check
      _
    $region23: #{tpu_custom_call.1} parent=1 // pred_check_branch
      %197 = sbr.rel (0) target = $region25
    $region24: #{tpu_custom_call.1} parent=1 // pred_region
      %198 = dma.done [#allocation4], 1152
    $region25: #{tpu_custom_call.1} parent=1 // pred_fallthru
      _
    %199 = vsyncpa [#allocation3], 1
    %200 = vsyncpa [#allocation6], 1
    %201 = vsyncpa [#allocation4], 1

</llo_original>
